<compile_context>
chip_gen: v7x
topology: tpu7x:2x2x1
jax: 0.10.0
libtpu: 0.0.40
codegen_flags: <defaults>
</compile_context>

<pallas_src>
import math

import jax
import jax.numpy as jnp
import numpy as np
from jax.experimental import pallas as pl
from jax.experimental.pallas import tpu as pltpu


# ----------------------------- configuration -------------------------------
N_NETWORKS = 4          # ensemble size E
INPUT_SIZE = 8          # input features
HIDDEN = (32, 32)       # hidden layer widths
OUTPUT_SIZE = 8         # output features
LANE = 128              # packed width: E * HIDDEN = 128 (one full MXU/vreg lane tile)
BLOCK_BATCH = 128       # batch rows per grid step (sublane-aligned)
# NormalizeLayer config (lengths must sum to INPUT_SIZE)
NORMALIZE_CFG = dict(
    x_min=[-1.0, 0.0],
    x_max=[1.0, 5.0],
    u=[1.0, 1.0],
    l=[-1.0, 0.0],
    lengths=[4, 4],
)


# ------------------------------ Pallas kernel -------------------------------
def det_ensemble_forward(x, w_all, *, in_size, out_size, lane=LANE,
                         block_batch=BLOCK_BATCH):
    """Packed ensemble MLP forward.

    x      : (N, in_size)  input batch (any N; padded to a multiple of block_batch)
    w_all  : (in_size + 4*lane + 24, lane) packed [W1; W2; W3''; Rm; Rv; b1; b2; b3]
    returns (mean, var), each (N, out_size)
    """
    n = x.shape[0]
    pad = (-n) % block_batch
    if pad:
        x = jnp.concatenate([x, jnp.zeros((pad, in_size), x.dtype)], axis=0)
    n_total = x.shape[0]
    n_steps = n_total // block_batch
    w_rows = w_all.shape[0]

    # Row offsets inside the packed weight buffer (all 8-sublane aligned).
    r_w2 = in_size
    r_w3 = r_w2 + lane
    r_rm = r_w3 + lane
    r_rv = r_rm + lane
    r_b1 = r_rv + lane
    r_b2 = r_b1 + 8
    r_b3 = r_b2 + 8
    assert w_rows == r_b3 + 8

    def kernel(x_ref, w_ref, o_ref):
        cdt = w_ref.dtype                                  # MXU operand dtype
        xv = x_ref[...].astype(cdt)                        # (B, IN)

        # Static, sublane-aligned slices of the single VMEM-resident buffer.
        w1 = w_ref[pl.ds(0, in_size), :]                   # (IN,  lane)
        w2 = w_ref[pl.ds(r_w2, lane), :]                   # (lane, lane)
        w3 = w_ref[pl.ds(r_w3, lane), :]                   # (lane, lane)
        rm = w_ref[pl.ds(r_rm, lane), :]                   # (lane, lane)
        rv = w_ref[pl.ds(r_rv, lane), :]                   # (lane, lane)
        b1 = w_ref[pl.ds(r_b1, 1), :]                      # (1, lane)
        b2 = w_ref[pl.ds(r_b2, 1), :]
        b3 = w_ref[pl.ds(r_b3, 1), :]

        # Packed MLP; every dot is a lane-dense MXU tile, f32 accumulation.
        h = jnp.maximum(
            jnp.dot(xv, w1, preferred_element_type=jnp.float32) + b1, 0.0)
        h = jnp.maximum(
            jnp.dot(h.astype(cdt), w2, preferred_element_type=jnp.float32) + b2, 0.0)
        # z: lanes 0..E*O-1 = centered deviations (y_e - mean), lanes E*O..E*O+O-1 = mean.
        z = jnp.dot(h.astype(cdt), w3, preferred_element_type=jnp.float32) + b3

        # Ensemble reduction on the MXU: lanes 0..O-1 = mean, O..2O-1 = variance.
        mv = (jnp.dot(z.astype(cdt), rm, preferred_element_type=jnp.float32)
              + jnp.dot((z * z).astype(cdt), rv,
                        preferred_element_type=jnp.float32))
        o_ref[...] = mv                                    # one lane-dense store

    flops = 2 * n_total * (in_size * lane + 4 * lane * lane)
    bytes_accessed = (int(x.size) * x.dtype.itemsize
                      + int(w_all.size) * w_all.dtype.itemsize
                      + n_total * lane * 4)

    out = pl.pallas_call(
        kernel,
        out_shape=jax.ShapeDtypeStruct((n_total, lane), jnp.float32),
        grid_spec=pl.GridSpec(
            grid=(n_steps,),
            in_specs=[
                pl.BlockSpec((block_batch, in_size), lambda i: (i, 0)),  # x tile
                pl.BlockSpec((w_rows, lane), lambda i: (0, 0)),          # resident weights
            ],
            out_specs=pl.BlockSpec((block_batch, lane), lambda i: (i, 0)),
        ),
        # Batch axis is independent -> shard across v7x's two TensorCores.
        compiler_params=pltpu.CompilerParams(
            dimension_semantics=("parallel",)),
        cost_estimate=pl.CostEstimate(
            flops=flops, transcendentals=0, bytes_accessed=bytes_accessed),
    )(x, w_all)

    mean = out[:n, :out_size]
    var = out[:n, out_size:2 * out_size]
    return mean, var


# ------------------------- parameter initialization -------------------------
def normalize_coeffs(cfg, input_size):
    """Reproduce NormalizeLayer's per-feature affine coefficients a, b."""
    a = np.zeros((input_size,), np.float32)
    b = np.zeros((input_size,), np.float32)
    prev = 0
    for x_min, x_max, u, l, length in zip(cfg['x_min'], cfg['x_max'],
                                          cfg['u'], cfg['l'], cfg['lengths']):
        for i in range(prev, prev + length):
            a[i] = (u - l) / (x_max - x_min)
            b[i] = l - x_min * (u - l) / (x_max - x_min)
        prev += length
    return jnp.asarray(a)[None, :], jnp.asarray(b)[None, :]


def init_linear(key, fan_in, fan_out):
    """xavier_uniform_ weight (stored as (in, out)), PyTorch-default bias."""
    kw, kb = jax.random.split(key)
    bound_w = math.sqrt(6.0 / (fan_in + fan_out))
    w = jax.random.uniform(kw, (fan_in, fan_out), jnp.float32, -bound_w, bound_w)
    bound_b = 1.0 / math.sqrt(fan_in)
    b = jax.random.uniform(kb, (fan_out,), jnp.float32, -bound_b, bound_b)
    return w, b


def build_ensemble_params(key, n_networks, input_size, hidden, output_size):
    dims = (input_size,) + tuple(hidden) + (output_size,)
    w_stacks = [[] for _ in range(len(dims) - 1)]
    b_stacks = [[] for _ in range(len(dims) - 1)]
    keys = jax.random.split(key, n_networks)
    for e in range(n_networks):            # different seed per ensemble member
        layer_keys = jax.random.split(keys[e], len(dims) - 1)
        for li in range(len(dims) - 1):
            w, b = init_linear(layer_keys[li], dims[li], dims[li + 1])
            w_stacks[li].append(w)
            b_stacks[li].append(b)
    ws = [jnp.stack(s, axis=0) for s in w_stacks]   # (E, in, out)
    bs = [jnp.stack(s, axis=0) for s in b_stacks]   # (E, out)
    return ws, bs


def pack_ensemble_params(a_vec, b_vec, ws, bs, lane=LANE, dtype=jnp.float32):
    """Fold normalize + ensemble mean/var reduction into one packed buffer."""
    w1s, w2s, w3s = [np.asarray(w, np.float32) for w in ws]
    b1s, b2s, b3s = [np.asarray(b, np.float32) for b in bs]
    a = np.asarray(a_vec, np.float32).reshape(-1)            # (IN,)
    bn = np.asarray(b_vec, np.float32).reshape(-1)           # (IN,)
    E, IN, H1 = w1s.shape
    H2 = w2s.shape[2]
    O = w3s.shape[2]
    assert E * H1 == lane and E * H2 == lane and E * O + O <= lane

    # Layer 1: fold NormalizeLayer: (a*x+b)@W1 + b1 == x@(diag(a)W1) + (b@W1 + b1).
    w1f = a[None, :, None] * w1s                              # (E, IN, H1)
    b1f = np.einsum('i,eio->eo', bn, w1s) + b1s               # (E, H1)
    w1p = np.concatenate([w1f[e] for e in range(E)], axis=1)  # (IN, lane)
    b1p = np.concatenate([b1f[e] for e in range(E)], axis=0)  # (lane,)

    # Layer 2: block-diagonal over members.
    w2p = np.zeros((lane, lane), np.float32)
    for e in range(E):
        w2p[e * H1:(e + 1) * H1, e * H2:(e + 1) * H2] = w2s[e]
    b2p = np.concatenate([b2s[e] for e in range(E)], axis=0)  # (lane,)

    # Layer 3: cols [e*O,(e+1)*O) = centered deviations y_e - mean,
    #          cols [E*O, E*O+O)  = ensemble mean, rest zero.
    w3p = np.zeros((lane, lane), np.float32)
    b3p = np.zeros((lane,), np.float32)
    b3_mean = b3s.mean(axis=0)                                # (O,)
    for e in range(E):                # output member block (deviation)
        for f in range(E):            # input member block
            coef = (1.0 if e == f else 0.0) - 1.0 / E
            w3p[f * H2:(f + 1) * H2, e * O:(e + 1) * O] = coef * w3s[f]
        b3p[e * O:(e + 1) * O] = b3s[e] - b3_mean
    for f in range(E):
        w3p[f * H2:(f + 1) * H2, E * O:E * O + O] = w3s[f] / E
    b3p[E * O:E * O + O] = b3_mean

    # Reduction matrices: out = z @ Rm + (z*z) @ Rv
    #   -> lanes 0..O-1 = mean, lanes O..2O-1 = population variance.
    rm = np.zeros((lane, lane), np.float32)
    rm[E * O + np.arange(O), np.arange(O)] = 1.0
    rv = np.zeros((lane, lane), np.float32)
    for e in range(E):
        rv[e * O + np.arange(O), O + np.arange(O)] = 1.0 / E

    def bias_block(v):                # 8-sublane-aligned bias rows
        blk = np.zeros((8, lane), np.float32)
        blk[0, :v.shape[0]] = v
        return blk

    w_all = np.concatenate(
        [w1p, w2p, w3p, rm, rv,
         bias_block(b1p), bias_block(b2p), bias_block(b3p)], axis=0)
    return jnp.asarray(w_all, dtype)


# ------------------------------ plain-JAX reference --------------------------
def reference_forward(x, a_vec, b_vec, ws, bs):
    outs = []
    for e in range(ws[0].shape[0]):
        h = a_vec * x + b_vec
        h = jnp.maximum(h @ ws[0][e] + bs[0][e], 0.0)
        h = jnp.maximum(h @ ws[1][e] + bs[1][e], 0.0)
        outs.append(h @ ws[2][e] + bs[2][e])
    means = jnp.stack(outs, axis=1)                 # (B, E, O)
    mean = jnp.mean(means, axis=1)
    var = jnp.mean((means - mean[:, None, :]) ** 2, axis=1)
    return mean, var


# ----------------------------------- main ------------------------------------
if __name__ == "__main__":
    key = jax.random.PRNGKey(0)
    k_x, k_params = jax.random.split(key)

    n_batch = 512          # 4 grid steps of 128-row tiles (amortizes weight DMA)
    x = jax.random.normal(k_x, (n_batch, INPUT_SIZE), jnp.float32)
    a_vec, b_vec = normalize_coeffs(NORMALIZE_CFG, INPUT_SIZE)
    ws, bs = build_ensemble_params(k_params, N_NETWORKS, INPUT_SIZE,
                                   HIDDEN, OUTPUT_SIZE)

    ref_mean, ref_var = reference_forward(x, a_vec, b_vec, ws, bs)
    ref_mean = np.asarray(ref_mean)
    ref_var = np.asarray(ref_var)

    # Pure-f32 validation path (tight tolerances).
    w_f32 = pack_ensemble_params(a_vec, b_vec, ws, bs, dtype=jnp.float32)
    m32, v32 = det_ensemble_forward(x, w_f32, in_size=INPUT_SIZE,
                                    out_size=OUTPUT_SIZE)
    m32, v32 = jax.block_until_ready((m32, v32))
    assert np.allclose(np.asarray(m32), ref_mean, rtol=1e-4, atol=1e-4)
    assert np.allclose(np.asarray(v32), ref_var, rtol=1e-4, atol=1e-4)

    # bf16-weight production path (half the weight DMA, fewer MXU passes);
    # looser tolerances per bf16 operand precision.
    w_bf16 = pack_ensemble_params(a_vec, b_vec, ws, bs, dtype=jnp.bfloat16)
    mb, vb = det_ensemble_forward(x, w_bf16, in_size=INPUT_SIZE,
                                  out_size=OUTPUT_SIZE)
    mb, vb = jax.block_until_ready((mb, vb))
    assert np.allclose(np.asarray(mb), ref_mean, rtol=1e-1, atol=3e-2)
    assert np.allclose(np.asarray(vb), ref_var, rtol=1e-1, atol=3e-2)

    print("KERNEL_OK")
</pallas_src>

<mosaic_0001>
module attributes {stable_mosaic.version = 11 : i64} {
  func.func @kernel(%arg0: i32, %arg1: memref<128x8xf32, #tpu.memory_space<vmem>>, %arg2: memref<544x128xf32, #tpu.memory_space<vmem>>, %arg3: memref<128x128xf32, #tpu.memory_space<vmem>>) attributes {dimension_semantics = [#tpu.dimension_semantics<parallel>], iteration_bounds = array<i64: 4>, scalar_prefetch = 0 : i64, scratch_operands = 0 : i64, tpu.core_type = #tpu.core_type<tc>, window_params = [{transform_indices = @transform_0, window_bounds = array<i64: 128, 8>}, {pipeline_mode = #tpu.pipeline_mode<synchronous>, transform_indices = @transform_1, window_bounds = array<i64: 544, 128>}, {transform_indices = @transform_2, window_bounds = array<i64: 128, 128>}]} {
    %c0 = arith.constant 0 : index
    %c0_0 = arith.constant 0 : index
    %0 = vector.load %arg1[%c0, %c0_0] : memref<128x8xf32, #tpu.memory_space<vmem>>, vector<128x8xf32>
    %c0_1 = arith.constant 0 : index
    %c0_2 = arith.constant 0 : index
    %1 = vector.load %arg2[%c0_1, %c0_2] : memref<544x128xf32, #tpu.memory_space<vmem>>, vector<8x128xf32>
    %c8 = arith.constant 8 : index
    %c0_3 = arith.constant 0 : index
    %2 = vector.load %arg2[%c8, %c0_3] : memref<544x128xf32, #tpu.memory_space<vmem>>, vector<128x128xf32>
    %c136 = arith.constant 136 : index
    %c0_4 = arith.constant 0 : index
    %3 = vector.load %arg2[%c136, %c0_4] : memref<544x128xf32, #tpu.memory_space<vmem>>, vector<128x128xf32>
    %c264 = arith.constant 264 : index
    %c0_5 = arith.constant 0 : index
    %4 = vector.load %arg2[%c264, %c0_5] : memref<544x128xf32, #tpu.memory_space<vmem>>, vector<128x128xf32>
    %c392 = arith.constant 392 : index
    %c0_6 = arith.constant 0 : index
    %5 = vector.load %arg2[%c392, %c0_6] : memref<544x128xf32, #tpu.memory_space<vmem>>, vector<128x128xf32>
    %c520 = arith.constant 520 : index
    %c0_7 = arith.constant 0 : index
    %6 = vector.load %arg2[%c520, %c0_7] : memref<544x128xf32, #tpu.memory_space<vmem>>, vector<1x128xf32>
    %c528 = arith.constant 528 : index
    %c0_8 = arith.constant 0 : index
    %7 = vector.load %arg2[%c528, %c0_8] : memref<544x128xf32, #tpu.memory_space<vmem>>, vector<1x128xf32>
    %c536 = arith.constant 536 : index
    %c0_9 = arith.constant 0 : index
    %8 = vector.load %arg2[%c536, %c0_9] : memref<544x128xf32, #tpu.memory_space<vmem>>, vector<1x128xf32>
    %cst = arith.constant dense<0.000000e+00> : vector<128x128xf32>
    %9 = tpu.matmul %0, %1, %cst {dimension_numbers = #tpu.dot_dimension_numbers<[1], [0], [0], [1], [0, 0, 1, 1], [], []>} : vector<128x8xf32>, vector<8x128xf32>, vector<128x128xf32> -> vector<128x128xf32>
    %10 = vector.broadcast %6 : vector<1x128xf32> to vector<128x128xf32>
    %11 = arith.addf %9, %10 : vector<128x128xf32>
    %cst_10 = arith.constant 0.000000e+00 : f32
    %12 = vector.broadcast %cst_10 : f32 to vector<128x128xf32>
    %13 = arith.maximumf %11, %12 : vector<128x128xf32>
    %cst_11 = arith.constant dense<0.000000e+00> : vector<128x128xf32>
    %14 = tpu.matmul %13, %2, %cst_11 {dimension_numbers = #tpu.dot_dimension_numbers<[1], [0], [0], [1], [0, 0, 1, 1], [], []>} : vector<128x128xf32>, vector<128x128xf32>, vector<128x128xf32> -> vector<128x128xf32>
    %15 = vector.broadcast %7 : vector<1x128xf32> to vector<128x128xf32>
    %16 = arith.addf %14, %15 : vector<128x128xf32>
    %cst_12 = arith.constant 0.000000e+00 : f32
    %17 = vector.broadcast %cst_12 : f32 to vector<128x128xf32>
    %18 = arith.maximumf %16, %17 : vector<128x128xf32>
    %cst_13 = arith.constant dense<0.000000e+00> : vector<128x128xf32>
    %19 = tpu.matmul %18, %3, %cst_13 {dimension_numbers = #tpu.dot_dimension_numbers<[1], [0], [0], [1], [0, 0, 1, 1], [], []>} : vector<128x128xf32>, vector<128x128xf32>, vector<128x128xf32> -> vector<128x128xf32>
    %20 = vector.broadcast %8 : vector<1x128xf32> to vector<128x128xf32>
    %21 = arith.addf %19, %20 : vector<128x128xf32>
    %cst_14 = arith.constant dense<0.000000e+00> : vector<128x128xf32>
    %22 = tpu.matmul %21, %4, %cst_14 {dimension_numbers = #tpu.dot_dimension_numbers<[1], [0], [0], [1], [0, 0, 1, 1], [], []>} : vector<128x128xf32>, vector<128x128xf32>, vector<128x128xf32> -> vector<128x128xf32>
    %23 = arith.mulf %21, %21 : vector<128x128xf32>
    %cst_15 = arith.constant dense<0.000000e+00> : vector<128x128xf32>
    %24 = tpu.matmul %23, %5, %cst_15 {dimension_numbers = #tpu.dot_dimension_numbers<[1], [0], [0], [1], [0, 0, 1, 1], [], []>} : vector<128x128xf32>, vector<128x128xf32>, vector<128x128xf32> -> vector<128x128xf32>
    %25 = arith.addf %22, %24 : vector<128x128xf32>
    %c0_16 = arith.constant 0 : index
    %c0_17 = arith.constant 0 : index
    %26 = vector.load %arg3[%c0_16, %c0_17] : memref<128x128xf32, #tpu.memory_space<vmem>>, vector<128x128xf32>
    tpu.vector_store %arg3[%c0_16, %c0_17], %25 {strides = array<i32>} : memref<128x128xf32, #tpu.memory_space<vmem>>, vector<128x128xf32>,
    return
  }
  func.func @transform_0(%arg0: i32) -> (i32, i32) {
    %c0_i32 = arith.constant 0 : i32
    %c0_i32_0 = arith.constant 0 : i32
    return %arg0, %c0_i32 : i32, i32
  }
  func.func @transform_1(%arg0: i32) -> (i32, i32) {
    %c0_i32 = arith.constant 0 : i32
    %c0_i32_0 = arith.constant 0 : i32
    %c0_i32_1 = arith.constant 0 : i32
    return %c0_i32, %c0_i32_0 : i32, i32
  }
  func.func @transform_2(%arg0: i32) -> (i32, i32) {
    %c0_i32 = arith.constant 0 : i32
    %c0_i32_0 = arith.constant 0 : i32
    return %arg0, %c0_i32 : i32, i32
  }
}

</mosaic_0001>

<llo_original>
// kernel: tpu_custom_call.1
$region0: #{tpu_custom_call.1}
  #allocation0 [shape = 'u32[]', space=smem, size = 0x4, offset = 0x4, fixed_abs, tag = 'smem constant byte address 0x4 - core index']
  #allocation1 [shape = 'u32[144,128]{1,0:T(1,128)}', space=vmem, size = 0x12000, scoped, tag = 'internal scratch']
  %s0 = inlined_call_operand.vmem [shape: f32[512,8], index: 0, kind: input, shape index: {}]
  %s1 = inlined_call_operand.vmem [shape: f32[544,128], index: 1, kind: input, shape index: {}]
  %s2 = inlined_call_operand.hbm [shape: f32[512,128], index: 2, kind: output, shape index: {}]
  %s3 = sld [smem:[#allocation0]]
  $region41: #{tpu_custom_call.1} parent=0
    _
  %s5 = ssub.s32 1, %s3
  %s6 = scalar_select 0, %s5, %s3
  $region1: #{tpu_custom_call.1} parent=0
    #allocation2 [shape = 'u8[131072]{0}', space=vmem, size = 0x20000, scoped, tag = 'output window, operand 0']
    #allocation3 [shape = 's32[2]{0}', space=sflag, size = 0x8, scoped, tag = 'scoped memory for tpu_custom_call.1']
    %7 = vsyncpa [#allocation3], 0
    %s8 = scalar_lea.sflag [#allocation3], 1
    %9 = vsyncpa %s8, 0
    loop: start=0, step=1, limit=6
    $region2: #{tpu_custom_call.1} parent=1 // loop_pre_header
      _
    $region3: #{tpu_custom_call.1} parent=1 // loop_header
      %s11 = sphi 0, %s15
      %p12 = scmp.ge.s32.totalorder %s11, 6
      %s21 = sphi 0, %s23
      %s24 = sphi 0, %s21
      %s25 = sphi 0, %s24
      %s41 = sphi 0, %s25
      %s45 = sphi 0, %s45
      %s47 = sphi 0, %s45
      %s48 = sphi 0, %s47
      %s62 = sphi 0, %s48
      %s68 = sphi 0, %s70
      %s71 = sphi 0, %s68
      %s72 = sphi 0, %s71
      %s88 = sphi 0, %s72
    $region4: #{tpu_custom_call.1} parent=1 // loop_header_branch
      %14 = sbr.rel (%p12) target = $region8
    $region5: #{tpu_custom_call.1} parent=1 // loop_body
      %s16 = ssub.s32 %s11, 1
      %s17 = ssub.s32 %s11, 2
      %s18 = sadd.s32 %s11, 1
      %s19 = ssub.s32 %s11, %s18
      %p20 = scmp.eq.s32.totalorder %s19, 0
      %s22 = sadd.s32 %s21, 1
      %s23 = scalar_select %p20, %s21, %s22
      %p26 = pneg %p20
      %p27 = scmp.eq.s32.totalorder %s11, 3
      %p28 = por %p26, %p27
      %p29 = scmp.ne.s32.totalorder %s21, %s24
      %p30 = scmp.eq.s32.totalorder %s11, 0
      %p31 = por %p29, %p30
      %p32 = scmp.ne.s32.totalorder %s21, %s24
      %p33 = scmp.eq.s32.totalorder %s16, 3
      %p34 = por %p32, %p33
      %p35 = scmp.ne.s32.totalorder %s24, %s25
      %p36 = scmp.eq.s32.totalorder %s16, 0
      %p37 = por %p35, %p36
      %p38 = scmp.ne.s32.totalorder %s24, %s25
      %p39 = scmp.eq.s32.totalorder %s17, 3
      %p40 = por %p38, %p39
      %p42 = scmp.ne.s32.totalorder %s25, %s41
      %p43 = scmp.eq.s32.totalorder %s17, 0
      %p44 = por %p42, %p43
      %s46 = sadd.s32 %s45, 1
      %p49 = scmp.eq.s32.totalorder %s11, 3
      %p50 = scmp.ne.s32.totalorder %s45, %s47
      %p51 = scmp.eq.s32.totalorder %s11, 0
      %p52 = por %p50, %p51
      %p53 = scmp.ne.s32.totalorder %s45, %s47
      %p54 = scmp.eq.s32.totalorder %s16, 3
      %p55 = por %p53, %p54
      %p56 = scmp.ne.s32.totalorder %s47, %s48
      %p57 = scmp.eq.s32.totalorder %s16, 0
      %p58 = por %p56, %p57
      %p59 = scmp.ne.s32.totalorder %s47, %s48
      %p60 = scmp.eq.s32.totalorder %s17, 3
      %p61 = por %p59, %p60
      %p63 = scmp.ne.s32.totalorder %s48, %s62
      %p64 = scmp.eq.s32.totalorder %s17, 0
      %p65 = por %p63, %p64
      %s66 = ssub.s32 %s11, %s18
      %p67 = scmp.eq.s32.totalorder %s66, 0
      %s69 = sadd.s32 %s68, 1
      %s70 = scalar_select %p67, %s68, %s69
      %p73 = pneg %p67
      %p74 = scmp.eq.s32.totalorder %s11, 3
      %p75 = por %p73, %p74
      %p76 = scmp.ne.s32.totalorder %s68, %s71
      %p77 = scmp.eq.s32.totalorder %s11, 0
      %p78 = por %p76, %p77
      %p79 = scmp.ne.s32.totalorder %s68, %s71
      %p80 = scmp.eq.s32.totalorder %s16, 3
      %p81 = por %p79, %p80
      %p82 = scmp.ne.s32.totalorder %s71, %s72
      %p83 = scmp.eq.s32.totalorder %s16, 0
      %p84 = por %p82, %p83
      %p85 = scmp.ne.s32.totalorder %s71, %s72
      %p86 = scmp.eq.s32.totalorder %s17, 3
      %p87 = por %p85, %p86
      %p89 = scmp.ne.s32.totalorder %s72, %s88
      %p90 = scmp.eq.s32.totalorder %s17, 0
      %p91 = por %p89, %p90
      %p92 = scmp.le.s32.totalorder 1, %s11
      %p93 = scmp.lt.s32.totalorder %s11, 5
      %p94 = pnand %p92, %p93
      %p95 = pneg %p94
      // Predicated region
      $region9: #{tpu_custom_call.1} parent=5 // pred_check
        _
      $region10: #{tpu_custom_call.1} parent=5 // pred_check_branch
        %97 = sbr.rel (%p94) target = $region12
      $region11: #{tpu_custom_call.1} parent=5 // pred_region
        %s98 = ssub.s32 %s11, 1
        // Predicated region
        $region13: #{tpu_custom_call.1} parent=11 // pred_check
          %p99 = pneg %p58
        $region14: #{tpu_custom_call.1} parent=11 // pred_check_branch
          %101 = sbr.rel (%p99) target = $region16
        $region15: #{tpu_custom_call.1} parent=11 // pred_region
          _
        $region16: #{tpu_custom_call.1} parent=11 // pred_fallthru
          _
      $region12: #{tpu_custom_call.1} parent=5 // pred_fallthru
        _
      %p102 = scmp.lt.s32.totalorder %s11, 4
      // Predicated region
      $region17: #{tpu_custom_call.1} parent=5 // pred_check
        %p103 = pneg %p102
      $region18: #{tpu_custom_call.1} parent=5 // pred_check_branch
        %105 = sbr.rel (%p103) target = $region20
      $region19: #{tpu_custom_call.1} parent=5 // pred_region
        // Predicated region
        $region21: #{tpu_custom_call.1} parent=19 // pred_check
          %p106 = pneg %p31
        $region22: #{tpu_custom_call.1} parent=19 // pred_check_branch
          %108 = sbr.rel (%p106) target = $region24
        $region23: #{tpu_custom_call.1} parent=19 // pred_region
          %s109 = smul.u32 16, %s11
          %p110 = scmp.lt.s32.totalorder %s109, 63
          %s111 = scalar_select %p110, %s109, 63
          %s112 = smul.addr %s111, 8
          %s113 = scalar_lea.vmem %s0, %s112
          %s114 = smul.u32 16, %s11
        $region24: #{tpu_custom_call.1} parent=19 // pred_fallthru
          _
      $region20: #{tpu_custom_call.1} parent=5 // pred_fallthru
        _
      %p115 = scmp.le.s32.totalorder 1, %s11
      %p116 = scmp.lt.s32.totalorder %s11, 5
      %p117 = pnand %p115, %p116
      %p118 = pneg %p117
      // Predicated region
      $region25: #{tpu_custom_call.1} parent=5 // pred_check
        _
      $region26: #{tpu_custom_call.1} parent=5 // pred_check_branch
        %120 = sbr.rel (%p117) target = $region28
      $region27: #{tpu_custom_call.1} parent=5 // pred_region
        %s121 = ssub.s32 %s11, 1
        %s122 = smul.u32 16, %s16
        %p123 = scmp.lt.s32.totalorder %s122, 63
        %s124 = scalar_select %p123, %s122, 63
        %s125 = smul.addr %s124, 8
        %s126 = scalar_lea.vmem %s0, %s125
        %p127 = pneg %p37
        %p128 = pneg %p34
        %p129 = pneg %p58
        %p130 = pneg %p55
        %p131 = pneg %p84
        %p132 = pneg %p81
        %s133 = sand.u32 %s71, 1
        %s134 = scalar_lea.sflag [#allocation3], %s133
        %s135 = sand.u32 %s71, 1
        %s136 = smul.addr %s135, 128
        %s137 = scalar_lea.vmem [#allocation2], %s136
        %s138 = smul.u32 16, %s16
        %p139 = scmp.lt.s32.totalorder %s138, 63
        %s140 = scalar_select %p139, %s138, 63
        %s141 = smul.addr %s140, 8
        %s142 = scalar_lea.vmem %s0, %s141
        %s143 = smul.u32 16, %s16
        %s144 = smul.u32 16, %s16
        %v145 = vld [vmem:[%s142] sm:$0xff]
        %v146 = vld [vmem:[%s142 + $0x8] sm:$0xff]
        %v147 = vld [vmem:[%s142 + $0x10] sm:$0xff]
        %v148 = vld [vmem:[%s142 + $0x18] sm:$0xff]
        %v149 = vld [vmem:[%s142 + $0x20] sm:$0xff]
        %v150 = vld [vmem:[%s142 + $0x28] sm:$0xff]
        %v151 = vld [vmem:[%s142 + $0x30] sm:$0xff]
        %v152 = vld [vmem:[%s142 + $0x38] sm:$0xff]
        %v153 = vld [vmem:[%s142 + $0x40] sm:$0xff]
        %v154 = vld [vmem:[%s142 + $0x48] sm:$0xff]
        %v155 = vld [vmem:[%s142 + $0x50] sm:$0xff]
        %v156 = vld [vmem:[%s142 + $0x58] sm:$0xff]
        %v157 = vld [vmem:[%s142 + $0x60] sm:$0xff]
        %v158 = vld [vmem:[%s142 + $0x68] sm:$0xff]
        %v159 = vld [vmem:[%s142 + $0x70] sm:$0xff]
        %v160 = vld [vmem:[%s142 + $0x78] sm:$0xff]
        %v161 = vld [vmem:[%s1] sm:$0xff]
        %v162 = vld [vmem:[%s1 + $0x8] sm:$0xff]
        %v163 = vld [vmem:[%s1 + $0x10] sm:$0xff]
        %v164 = vld [vmem:[%s1 + $0x18] sm:$0xff]
        %v165 = vld [vmem:[%s1 + $0x20] sm:$0xff]
        %v166 = vld [vmem:[%s1 + $0x28] sm:$0xff]
        %v167 = vld [vmem:[%s1 + $0x30] sm:$0xff]
        %v168 = vld [vmem:[%s1 + $0x38] sm:$0xff]
        %v169 = vld [vmem:[%s1 + $0x40] sm:$0xff]
        %v170 = vld [vmem:[%s1 + $0x48] sm:$0xff]
        %v171 = vld [vmem:[%s1 + $0x50] sm:$0xff]
        %v172 = vld [vmem:[%s1 + $0x58] sm:$0xff]
        %v173 = vld [vmem:[%s1 + $0x60] sm:$0xff]
        %v174 = vld [vmem:[%s1 + $0x68] sm:$0xff]
        %v175 = vld [vmem:[%s1 + $0x70] sm:$0xff]
        %v176 = vld [vmem:[%s1 + $0x78] sm:$0xff]
        %v177 = vld [vmem:[%s1 + $0x80] sm:$0xff]
        %v178 = vld [vmem:[%s1 + $0x88] sm:$0xff]
        %v179 = vld [vmem:[%s1 + $0x90] sm:$0xff]
        %v180 = vld [vmem:[%s1 + $0x98] sm:$0xff]
        %v181 = vld [vmem:[%s1 + $0xa0] sm:$0xff]
        %v182 = vld [vmem:[%s1 + $0xa8] sm:$0xff]
        %v183 = vld [vmem:[%s1 + $0xb0] sm:$0xff]
        %v184 = vld [vmem:[%s1 + $0xb8] sm:$0xff]
        %v185 = vld [vmem:[%s1 + $0xc0] sm:$0xff]
        %v186 = vld [vmem:[%s1 + $0xc8] sm:$0xff]
        %v187 = vld [vmem:[%s1 + $0xd0] sm:$0xff]
        %v188 = vld [vmem:[%s1 + $0xd8] sm:$0xff]
        %v189 = vld [vmem:[%s1 + $0xe0] sm:$0xff]
        %v190 = vld [vmem:[%s1 + $0xe8] sm:$0xff]
        %v191 = vld [vmem:[%s1 + $0xf0] sm:$0xff]
        %v192 = vld [vmem:[%s1 + $0xf8] sm:$0xff]
        %v193 = vld [vmem:[%s1 + $0x100] sm:$0xff]
        %v194 = vld [vmem:[%s1 + $0x108] sm:$0xff]
        %v195 = vld [vmem:[%s1 + $0x110] sm:$0xff]
        %v196 = vld [vmem:[%s1 + $0x118] sm:$0xff]
        %v197 = vld [vmem:[%s1 + $0x120] sm:$0xff]
        %v198 = vld [vmem:[%s1 + $0x128] sm:$0xff]
        %v199 = vld [vmem:[%s1 + $0x130] sm:$0xff]
        %v200 = vld [vmem:[%s1 + $0x138] sm:$0xff]
        %v201 = vld [vmem:[%s1 + $0x140] sm:$0xff]
        %v202 = vld [vmem:[%s1 + $0x148] sm:$0xff]
        %v203 = vld [vmem:[%s1 + $0x150] sm:$0xff]
        %v204 = vld [vmem:[%s1 + $0x158] sm:$0xff]
        %v205 = vld [vmem:[%s1 + $0x160] sm:$0xff]
        %v206 = vld [vmem:[%s1 + $0x168] sm:$0xff]
        %v207 = vld [vmem:[%s1 + $0x170] sm:$0xff]
        %v208 = vld [vmem:[%s1 + $0x178] sm:$0xff]
        %v209 = vld [vmem:[%s1 + $0x180] sm:$0xff]
        %v210 = vld [vmem:[%s1 + $0x188] sm:$0xff]
        %v211 = vld [vmem:[%s1 + $0x190] sm:$0xff]
        %v212 = vld [vmem:[%s1 + $0x198] sm:$0xff]
        %v213 = vld [vmem:[%s1 + $0x1a0] sm:$0xff]
        %v214 = vld [vmem:[%s1 + $0x1a8] sm:$0xff]
        %v215 = vld [vmem:[%s1 + $0x1b0] sm:$0xff]
        %v216 = vld [vmem:[%s1 + $0x1b8] sm:$0xff]
        %v217 = vld [vmem:[%s1 + $0x1c0] sm:$0xff]
        %v218 = vld [vmem:[%s1 + $0x1c8] sm:$0xff]
        %v219 = vld [vmem:[%s1 + $0x1d0] sm:$0xff]
        %v220 = vld [vmem:[%s1 + $0x1d8] sm:$0xff]
        %v221 = vld [vmem:[%s1 + $0x1e0] sm:$0xff]
        %v222 = vld [vmem:[%s1 + $0x1e8] sm:$0xff]
        %v223 = vld [vmem:[%s1 + $0x1f0] sm:$0xff]
        %v224 = vld [vmem:[%s1 + $0x1f8] sm:$0xff]
        %v225 = vld [vmem:[%s1 + $0x200] sm:$0xff]
        %v226 = vld [vmem:[%s1 + $0x208] sm:$0x1]
        %v227 = vld [vmem:[%s1 + $0x210] sm:$0x1]
        %v228 = vld [vmem:[%s1 + $0x218] sm:$0x1]
        %v229 = vlaneseq
        %v230 = vshrl.u32 %v229, 7
        %v231 = vsub.s32 0, %v230
        %v232 = vrot.slane %v226, %v231
        %vm233 = vcmask 64512
        %v235 = vsel %vm233, %v145, 0
        %v238 = vsel %vm233, %v146, 0
        %v241 = vsel %vm233, %v147, 0
        %v244 = vsel %vm233, %v148, 0
        %v247 = vsel %vm233, %v149, 0
        %v250 = vsel %vm233, %v150, 0
        %v253 = vsel %vm233, %v151, 0
        %v256 = vsel %vm233, %v152, 0
        %v259 = vsel %vm233, %v153, 0
        %v262 = vsel %vm233, %v154, 0
        %v265 = vsel %vm233, %v155, 0
        %v268 = vsel %vm233, %v156, 0
        %v271 = vsel %vm233, %v157, 0
        %v274 = vsel %vm233, %v158, 0
        %v277 = vsel %vm233, %v159, 0
        %v280 = vsel %vm233, %v160, 0
        %282 = vmatprep.subr.mxu0 0.0
        %283 = vmatpush1.msra.mxu0 %v161
        %284 = vmatprep.subr.mxu0 0.0
        %285 = vmatpush1.msra.mxu0 0.0
        %286 = vmatprep.subr.mxu0 0.0
        %287 = vmatpush1.msra.mxu0 0.0
        %288 = vmatprep.subr.mxu0 0.0
        %289 = vmatpush1.msra.mxu0 0.0
        %290 = vmatprep.subr.mxu0 0.0
        %291 = vmatpush1.msra.mxu0 0.0
        %292 = vmatprep.subr.mxu0 0.0
        %293 = vmatpush1.msra.mxu0 0.0
        %294 = vmatprep.subr.mxu0 0.0
        %295 = vmatpush1.msra.mxu0 0.0
        %296 = vmatprep.subr.mxu0 0.0
        %297 = vmatpush1.msra.mxu0 0.0
        %298 = vmatprep.subr.mxu0 0.0
        %299 = vmatpush1.msra.mxu0 0.0
        %300 = vmatprep.subr.mxu0 0.0
        %301 = vmatpush1.msra.mxu0 0.0
        %302 = vmatprep.subr.mxu0 0.0
        %303 = vmatpush1.msra.mxu0 0.0
        %304 = vmatprep.subr.mxu0 0.0
        %305 = vmatpush1.msra.mxu0 0.0
        %306 = vmatprep.subr.mxu0 0.0
        %307 = vmatpush1.msra.mxu0 0.0
        %308 = vmatprep.subr.mxu0 0.0
        %309 = vmatpush1.msra.mxu0 0.0
        %310 = vmatprep.subr.mxu0 0.0
        %311 = vmatpush1.msra.mxu0 0.0
        %312 = vmatprep.subr.mxu0 0.0
        %313 = vmatpush1.msra.mxu0 0.0
        %314 = vmatprep.subr.mxu0 0.0
        %315 = vmatpush1.msra.mxu0 0.0
        %316 = vmatprep.subr.mxu0 0.0
        %317 = vmatpush1.msra.mxu0 0.0
        %318 = vmatprep.subr.mxu0 0.0
        %319 = vmatpush1.msra.mxu0 0.0
        %320 = vmatprep.subr.mxu0 0.0
        %321 = vmatpush1.msra.mxu0 0.0
        %322 = vmatprep.subr.mxu0 0.0
        %323 = vmatpush1.msra.mxu0 0.0
        %324 = vmatprep.subr.mxu0 0.0
        %325 = vmatpush1.msra.mxu0 0.0
        %326 = vmatprep.subr.mxu0 0.0
        %327 = vmatpush1.msra.mxu0 0.0
        %328 = vmatprep.subr.mxu0 0.0
        %329 = vmatpush1.msra.mxu0 0.0
        %330 = vmatprep.subr.mxu0 0.0
        %331 = vmatpush1.msra.mxu0 0.0
        %332 = vmatprep.subr.mxu0 0.0
        %333 = vmatpush1.msra.mxu0 0.0
        %334 = vmatprep.subr.mxu0 0.0
        %335 = vmatpush1.msra.mxu0 0.0
        %336 = vmatprep.subr.mxu0 0.0
        %337 = vmatpush1.msra.mxu0 0.0
        %338 = vmatprep.subr.mxu0 0.0
        %339 = vmatpush1.msra.mxu0 0.0
        %340 = vmatprep.subr.mxu0 0.0
        %341 = vmatpush1.msra.mxu0 0.0
        %342 = vmatprep.subr.mxu0 0.0
        %343 = vmatpush1.msra.mxu0 0.0
        %344 = vmatprep.subr.mxu0 0.0
        %345 = vmatpush1.msra.mxu0 0.0
        %346 = vmatprep.mubr.f32.mxu0 0.0
        %347 = vmatmul.mubr.f32.gmra.mrb[0].mxu0 %v235
        %v348 = vpop.f32.mrb[0].mxu0
        %v349 = vadd.f32 %v232, %v348
        %v350 = vpop.f32.mrb[0].mxu0
        %351 = vmatprep.mubr.f32.mxu0 0.0
        %352 = vmatmul.mubr.f32.gmra.mrb[0].mxu0 %v238
        %v353 = vpop.f32.mrb[0].mxu0
        %v354 = vadd.f32 %v232, %v353
        %v355 = vpop.f32.mrb[0].mxu0
        %356 = vmatprep.mubr.f32.mxu0 0.0
        %357 = vmatmul.mubr.f32.gmra.mrb[0].mxu0 %v241
        %v358 = vpop.f32.mrb[0].mxu0
        %v359 = vadd.f32 %v232, %v358
        %v360 = vpop.f32.mrb[0].mxu0
        %361 = vmatprep.mubr.f32.mxu0 0.0
        %362 = vmatmul.mubr.f32.gmra.mrb[0].mxu0 %v244
        %v363 = vpop.f32.mrb[0].mxu0
        %v364 = vadd.f32 %v232, %v363
        %v365 = vpop.f32.mrb[0].mxu0
        %366 = vmatprep.mubr.f32.mxu0 0.0
        %367 = vmatmul.mubr.f32.gmra.mrb[0].mxu0 %v247
        %v368 = vpop.f32.mrb[0].mxu0
        %v369 = vadd.f32 %v232, %v368
        %v370 = vpop.f32.mrb[0].mxu0
        %371 = vmatprep.mubr.f32.mxu0 0.0
        %372 = vmatmul.mubr.f32.gmra.mrb[0].mxu0 %v250
        %v373 = vpop.f32.mrb[0].mxu0
        %v374 = vadd.f32 %v232, %v373
        %v375 = vpop.f32.mrb[0].mxu0
        %376 = vmatprep.mubr.f32.mxu0 0.0
        %377 = vmatmul.mubr.f32.gmra.mrb[0].mxu0 %v253
        %v378 = vpop.f32.mrb[0].mxu0
        %v379 = vadd.f32 %v232, %v378
        %v380 = vpop.f32.mrb[0].mxu0
        %381 = vmatprep.mubr.f32.mxu0 0.0
        %382 = vmatmul.mubr.f32.gmra.mrb[0].mxu0 %v256
        %v383 = vpop.f32.mrb[0].mxu0
        %v384 = vadd.f32 %v232, %v383
        %v385 = vpop.f32.mrb[0].mxu0
        %386 = vmatprep.mubr.f32.mxu0 0.0
        %387 = vmatmul.mubr.f32.gmra.mrb[0].mxu0 %v259
        %v388 = vpop.f32.mrb[0].mxu0
        %v389 = vadd.f32 %v232, %v388
        %v390 = vpop.f32.mrb[0].mxu0
        %391 = vmatprep.mubr.f32.mxu0 0.0
        %392 = vmatmul.mubr.f32.gmra.mrb[0].mxu0 %v262
        %v393 = vpop.f32.mrb[0].mxu0
        %v394 = vadd.f32 %v232, %v393
        %v395 = vpop.f32.mrb[0].mxu0
        %396 = vmatprep.mubr.f32.mxu0 0.0
        %397 = vmatmul.mubr.f32.gmra.mrb[0].mxu0 %v265
        %v398 = vpop.f32.mrb[0].mxu0
        %v399 = vadd.f32 %v232, %v398
        %v400 = vpop.f32.mrb[0].mxu0
        %401 = vmatprep.mubr.f32.mxu0 0.0
        %402 = vmatmul.mubr.f32.gmra.mrb[0].mxu0 %v268
        %v403 = vpop.f32.mrb[0].mxu0
        %v404 = vadd.f32 %v232, %v403
        %v405 = vpop.f32.mrb[0].mxu0
        %406 = vmatprep.mubr.f32.mxu0 0.0
        %407 = vmatmul.mubr.f32.gmra.mrb[0].mxu0 %v271
        %v408 = vpop.f32.mrb[0].mxu0
        %v409 = vadd.f32 %v232, %v408
        %v410 = vpop.f32.mrb[0].mxu0
        %411 = vmatprep.mubr.f32.mxu0 0.0
        %412 = vmatmul.mubr.f32.gmra.mrb[0].mxu0 %v274
        %v413 = vpop.f32.mrb[0].mxu0
        %v414 = vadd.f32 %v232, %v413
        %v415 = vpop.f32.mrb[0].mxu0
        %416 = vmatprep.mubr.f32.mxu0 0.0
        %417 = vmatmul.mubr.f32.gmra.mrb[0].mxu0 %v277
        %v418 = vpop.f32.mrb[0].mxu0
        %v419 = vadd.f32 %v232, %v418
        %v420 = vpop.f32.mrb[0].mxu0
        %421 = vmatprep.mubr.f32.mxu0 0.0
        %422 = vmatmul.mubr.f32.gmra.mrb[0].mxu0 %v280
        %v423 = vpop.f32.mrb[0].mxu0
        %v424 = vadd.f32 %v232, %v423
        %v425 = vpop.f32.mrb[0].mxu0
        %426 = vdwg.mxu0
        %v427 = vmax.f32 %v349, 0.0
        %v428 = vmax.f32 %v354, 0.0
        %v429 = vmax.f32 %v359, 0.0
        %v430 = vmax.f32 %v364, 0.0
        %v431 = vmax.f32 %v369, 0.0
        %v432 = vmax.f32 %v374, 0.0
        %v433 = vmax.f32 %v379, 0.0
        %v434 = vmax.f32 %v384, 0.0
        %v435 = vmax.f32 %v389, 0.0
        %v436 = vmax.f32 %v394, 0.0
        %v437 = vmax.f32 %v399, 0.0
        %v438 = vmax.f32 %v404, 0.0
        %v439 = vmax.f32 %v409, 0.0
        %v440 = vmax.f32 %v414, 0.0
        %v441 = vmax.f32 %v419, 0.0
        %v442 = vmax.f32 %v424, 0.0
        %v443 = vlaneseq
        %v444 = vshrl.u32 %v443, 7
        %v445 = vsub.s32 0, %v444
        %v446 = vrot.slane %v227, %v445
        %447 = vmatprep.subr.mxu0 0.0
        %448 = vmatpush1.msra.mxu0 %v162
        %449 = vmatprep.subr.mxu0 0.0
        %450 = vmatpush1.msra.mxu0 %v163
        %451 = vmatprep.subr.mxu0 0.0
        %452 = vmatpush1.msra.mxu0 %v164
        %453 = vmatprep.subr.mxu0 0.0
        %454 = vmatpush1.msra.mxu0 %v165
        %455 = vmatprep.subr.mxu0 0.0
        %456 = vmatpush1.msra.mxu0 %v166
        %457 = vmatprep.subr.mxu0 0.0
        %458 = vmatpush1.msra.mxu0 %v167
        %459 = vmatprep.subr.mxu0 0.0
        %460 = vmatpush1.msra.mxu0 %v168
        %461 = vmatprep.subr.mxu0 0.0
        %462 = vmatpush1.msra.mxu0 %v169
        %463 = vmatprep.subr.mxu0 0.0
        %464 = vmatpush1.msra.mxu0 %v170
        %465 = vmatprep.subr.mxu0 0.0
        %466 = vmatpush1.msra.mxu0 %v171
        %467 = vmatprep.subr.mxu0 0.0
        %468 = vmatpush1.msra.mxu0 %v172
        %469 = vmatprep.subr.mxu0 0.0
        %470 = vmatpush1.msra.mxu0 %v173
        %471 = vmatprep.subr.mxu0 0.0
        %472 = vmatpush1.msra.mxu0 %v174
        %473 = vmatprep.subr.mxu0 0.0
        %474 = vmatpush1.msra.mxu0 %v175
        %475 = vmatprep.subr.mxu0 0.0
        %476 = vmatpush1.msra.mxu0 %v176
        %477 = vmatprep.subr.mxu0 0.0
        %478 = vmatpush1.msra.mxu0 %v177
        %479 = vmatprep.subr.mxu0 0.0
        %480 = vmatpush1.msra.mxu0 0.0
        %481 = vmatprep.subr.mxu0 0.0
        %482 = vmatpush1.msra.mxu0 0.0
        %483 = vmatprep.subr.mxu0 0.0
        %484 = vmatpush1.msra.mxu0 0.0
        %485 = vmatprep.subr.mxu0 0.0
        %486 = vmatpush1.msra.mxu0 0.0
        %487 = vmatprep.subr.mxu0 0.0
        %488 = vmatpush1.msra.mxu0 0.0
        %489 = vmatprep.subr.mxu0 0.0
        %490 = vmatpush1.msra.mxu0 0.0
        %491 = vmatprep.subr.mxu0 0.0
        %492 = vmatpush1.msra.mxu0 0.0
        %493 = vmatprep.subr.mxu0 0.0
        %494 = vmatpush1.msra.mxu0 0.0
        %495 = vmatprep.subr.mxu0 0.0
        %496 = vmatpush1.msra.mxu0 0.0
        %497 = vmatprep.subr.mxu0 0.0
        %498 = vmatpush1.msra.mxu0 0.0
        %499 = vmatprep.subr.mxu0 0.0
        %500 = vmatpush1.msra.mxu0 0.0
        %501 = vmatprep.subr.mxu0 0.0
        %502 = vmatpush1.msra.mxu0 0.0
        %503 = vmatprep.subr.mxu0 0.0
        %504 = vmatpush1.msra.mxu0 0.0
        %505 = vmatprep.subr.mxu0 0.0
        %506 = vmatpush1.msra.mxu0 0.0
        %507 = vmatprep.subr.mxu0 0.0
        %508 = vmatpush1.msra.mxu0 0.0
        %509 = vmatprep.subr.mxu0 0.0
        %510 = vmatpush1.msra.mxu0 0.0
        %511 = vmatprep.mubr.f32.mxu0 0.0
        %512 = vmatmul.mubr.f32.gmra.mrb[0].mxu0 %v427
        %v513 = vpop.f32.mrb[0].mxu0
        %v514 = vadd.f32 %v446, %v513
        %v515 = vpop.f32.mrb[0].mxu0
        %516 = vmatprep.mubr.f32.mxu0 0.0
        %517 = vmatmul.mubr.f32.gmra.mrb[0].mxu0 %v428
        %v518 = vpop.f32.mrb[0].mxu0
        %v519 = vadd.f32 %v446, %v518
        %v520 = vpop.f32.mrb[0].mxu0
        %521 = vmatprep.mubr.f32.mxu0 0.0
        %522 = vmatmul.mubr.f32.gmra.mrb[0].mxu0 %v429
        %v523 = vpop.f32.mrb[0].mxu0
        %v524 = vadd.f32 %v446, %v523
        %v525 = vpop.f32.mrb[0].mxu0
        %526 = vmatprep.mubr.f32.mxu0 0.0
        %527 = vmatmul.mubr.f32.gmra.mrb[0].mxu0 %v430
        %v528 = vpop.f32.mrb[0].mxu0
        %v529 = vadd.f32 %v446, %v528
        %v530 = vpop.f32.mrb[0].mxu0
        %531 = vmatprep.mubr.f32.mxu0 0.0
        %532 = vmatmul.mubr.f32.gmra.mrb[0].mxu0 %v431
        %v533 = vpop.f32.mrb[0].mxu0
        %v534 = vadd.f32 %v446, %v533
        %v535 = vpop.f32.mrb[0].mxu0
        %536 = vmatprep.mubr.f32.mxu0 0.0
        %537 = vmatmul.mubr.f32.gmra.mrb[0].mxu0 %v432
        %v538 = vpop.f32.mrb[0].mxu0
        %v539 = vadd.f32 %v446, %v538
        %v540 = vpop.f32.mrb[0].mxu0
        %541 = vmatprep.mubr.f32.mxu0 0.0
        %542 = vmatmul.mubr.f32.gmra.mrb[0].mxu0 %v433
        %v543 = vpop.f32.mrb[0].mxu0
        %v544 = vadd.f32 %v446, %v543
        %v545 = vpop.f32.mrb[0].mxu0
        %546 = vmatprep.mubr.f32.mxu0 0.0
        %547 = vmatmul.mubr.f32.gmra.mrb[0].mxu0 %v434
        %v548 = vpop.f32.mrb[0].mxu0
        %v549 = vadd.f32 %v446, %v548
        %v550 = vpop.f32.mrb[0].mxu0
        %551 = vmatprep.mubr.f32.mxu0 0.0
        %552 = vmatmul.mubr.f32.gmra.mrb[0].mxu0 %v435
        %v553 = vpop.f32.mrb[0].mxu0
        %v554 = vadd.f32 %v446, %v553
        %v555 = vpop.f32.mrb[0].mxu0
        %556 = vmatprep.mubr.f32.mxu0 0.0
        %557 = vmatmul.mubr.f32.gmra.mrb[0].mxu0 %v436
        %v558 = vpop.f32.mrb[0].mxu0
        %v559 = vadd.f32 %v446, %v558
        %v560 = vpop.f32.mrb[0].mxu0
        %561 = vmatprep.mubr.f32.mxu0 0.0
        %562 = vmatmul.mubr.f32.gmra.mrb[0].mxu0 %v437
        %v563 = vpop.f32.mrb[0].mxu0
        %v564 = vadd.f32 %v446, %v563
        %v565 = vpop.f32.mrb[0].mxu0
        %566 = vmatprep.mubr.f32.mxu0 0.0
        %567 = vmatmul.mubr.f32.gmra.mrb[0].mxu0 %v438
        %v568 = vpop.f32.mrb[0].mxu0
        %v569 = vadd.f32 %v446, %v568
        %v570 = vpop.f32.mrb[0].mxu0
        %571 = vmatprep.mubr.f32.mxu0 0.0
        %572 = vmatmul.mubr.f32.gmra.mrb[0].mxu0 %v439
        %v573 = vpop.f32.mrb[0].mxu0
        %v574 = vadd.f32 %v446, %v573
        %v575 = vpop.f32.mrb[0].mxu0
        %576 = vmatprep.mubr.f32.mxu0 0.0
        %577 = vmatmul.mubr.f32.gmra.mrb[0].mxu0 %v440
        %v578 = vpop.f32.mrb[0].mxu0
        %v579 = vadd.f32 %v446, %v578
        %v580 = vpop.f32.mrb[0].mxu0
        %581 = vmatprep.mubr.f32.mxu0 0.0
        %582 = vmatmul.mubr.f32.gmra.mrb[0].mxu0 %v441
        %v583 = vpop.f32.mrb[0].mxu0
        %v584 = vadd.f32 %v446, %v583
        %v585 = vpop.f32.mrb[0].mxu0
        %586 = vmatprep.mubr.f32.mxu0 0.0
        %587 = vmatmul.mubr.f32.gmra.mrb[0].mxu0 %v442
        %v588 = vpop.f32.mrb[0].mxu0
        %v589 = vadd.f32 %v446, %v588
        %v590 = vpop.f32.mrb[0].mxu0
        %591 = vdwg.mxu0
        %v592 = vmax.f32 %v514, 0.0
        %v593 = vmax.f32 %v519, 0.0
        %v594 = vmax.f32 %v524, 0.0
        %v595 = vmax.f32 %v529, 0.0
        %v596 = vmax.f32 %v534, 0.0
        %v597 = vmax.f32 %v539, 0.0
        %v598 = vmax.f32 %v544, 0.0
        %v599 = vmax.f32 %v549, 0.0
        %v600 = vmax.f32 %v554, 0.0
        %v601 = vmax.f32 %v559, 0.0
        %v602 = vmax.f32 %v564, 0.0
        %v603 = vmax.f32 %v569, 0.0
        %v604 = vmax.f32 %v574, 0.0
        %v605 = vmax.f32 %v579, 0.0
        %v606 = vmax.f32 %v584, 0.0
        %v607 = vmax.f32 %v589, 0.0
        %v608 = vlaneseq
        %v609 = vshrl.u32 %v608, 7
        %v610 = vsub.s32 0, %v609
        %v611 = vrot.slane %v228, %v610
        %612 = vmatprep.subr.mxu0 0.0
        %613 = vmatpush1.msra.mxu0 %v178
        %614 = vmatprep.subr.mxu0 0.0
        %615 = vmatpush1.msra.mxu0 %v179
        %616 = vmatprep.subr.mxu0 0.0
        %617 = vmatpush1.msra.mxu0 %v180
        %618 = vmatprep.subr.mxu0 0.0
        %619 = vmatpush1.msra.mxu0 %v181
        %620 = vmatprep.subr.mxu0 0.0
        %621 = vmatpush1.msra.mxu0 %v182
        %622 = vmatprep.subr.mxu0 0.0
        %623 = vmatpush1.msra.mxu0 %v183
        %624 = vmatprep.subr.mxu0 0.0
        %625 = vmatpush1.msra.mxu0 %v184
        %626 = vmatprep.subr.mxu0 0.0
        %627 = vmatpush1.msra.mxu0 %v185
        %628 = vmatprep.subr.mxu0 0.0
        %629 = vmatpush1.msra.mxu0 %v186
        %630 = vmatprep.subr.mxu0 0.0
        %631 = vmatpush1.msra.mxu0 %v187
        %632 = vmatprep.subr.mxu0 0.0
        %633 = vmatpush1.msra.mxu0 %v188
        %634 = vmatprep.subr.mxu0 0.0
        %635 = vmatpush1.msra.mxu0 %v189
        %636 = vmatprep.subr.mxu0 0.0
        %637 = vmatpush1.msra.mxu0 %v190
        %638 = vmatprep.subr.mxu0 0.0
        %639 = vmatpush1.msra.mxu0 %v191
        %640 = vmatprep.subr.mxu0 0.0
        %641 = vmatpush1.msra.mxu0 %v192
        %642 = vmatprep.subr.mxu0 0.0
        %643 = vmatpush1.msra.mxu0 %v193
        %644 = vmatprep.subr.mxu0 0.0
        %645 = vmatpush1.msra.mxu0 0.0
        %646 = vmatprep.subr.mxu0 0.0
        %647 = vmatpush1.msra.mxu0 0.0
        %648 = vmatprep.subr.mxu0 0.0
        %649 = vmatpush1.msra.mxu0 0.0
        %650 = vmatprep.subr.mxu0 0.0
        %651 = vmatpush1.msra.mxu0 0.0
        %652 = vmatprep.subr.mxu0 0.0
        %653 = vmatpush1.msra.mxu0 0.0
        %654 = vmatprep.subr.mxu0 0.0
        %655 = vmatpush1.msra.mxu0 0.0
        %656 = vmatprep.subr.mxu0 0.0
        %657 = vmatpush1.msra.mxu0 0.0
        %658 = vmatprep.subr.mxu0 0.0
        %659 = vmatpush1.msra.mxu0 0.0
        %660 = vmatprep.subr.mxu0 0.0
        %661 = vmatpush1.msra.mxu0 0.0
        %662 = vmatprep.subr.mxu0 0.0
        %663 = vmatpush1.msra.mxu0 0.0
        %664 = vmatprep.subr.mxu0 0.0
        %665 = vmatpush1.msra.mxu0 0.0
        %666 = vmatprep.subr.mxu0 0.0
        %667 = vmatpush1.msra.mxu0 0.0
        %668 = vmatprep.subr.mxu0 0.0
        %669 = vmatpush1.msra.mxu0 0.0
        %670 = vmatprep.subr.mxu0 0.0
        %671 = vmatpush1.msra.mxu0 0.0
        %672 = vmatprep.subr.mxu0 0.0
        %673 = vmatpush1.msra.mxu0 0.0
        %674 = vmatprep.subr.mxu0 0.0
        %675 = vmatpush1.msra.mxu0 0.0
        %676 = vmatprep.mubr.f32.mxu0 0.0
        %677 = vmatmul.mubr.f32.gmra.mrb[0].mxu0 %v592
        %v678 = vpop.f32.mrb[0].mxu0
        %v679 = vadd.f32 %v611, %v678
        %v680 = vpop.f32.mrb[0].mxu0
        %681 = vmatprep.mubr.f32.mxu0 0.0
        %682 = vmatmul.mubr.f32.gmra.mrb[0].mxu0 %v593
        %v683 = vpop.f32.mrb[0].mxu0
        %v684 = vadd.f32 %v611, %v683
        %v685 = vpop.f32.mrb[0].mxu0
        %686 = vmatprep.mubr.f32.mxu0 0.0
        %687 = vmatmul.mubr.f32.gmra.mrb[0].mxu0 %v594
        %v688 = vpop.f32.mrb[0].mxu0
        %v689 = vadd.f32 %v611, %v688
        %v690 = vpop.f32.mrb[0].mxu0
        %691 = vmatprep.mubr.f32.mxu0 0.0
        %692 = vmatmul.mubr.f32.gmra.mrb[0].mxu0 %v595
        %v693 = vpop.f32.mrb[0].mxu0
        %v694 = vadd.f32 %v611, %v693
        %v695 = vpop.f32.mrb[0].mxu0
        %696 = vmatprep.mubr.f32.mxu0 0.0
        %697 = vmatmul.mubr.f32.gmra.mrb[0].mxu0 %v596
        %v698 = vpop.f32.mrb[0].mxu0
        %v699 = vadd.f32 %v611, %v698
        %v700 = vpop.f32.mrb[0].mxu0
        %701 = vmatprep.mubr.f32.mxu0 0.0
        %702 = vmatmul.mubr.f32.gmra.mrb[0].mxu0 %v597
        %v703 = vpop.f32.mrb[0].mxu0
        %v704 = vadd.f32 %v611, %v703
        %v705 = vpop.f32.mrb[0].mxu0
        %706 = vmatprep.mubr.f32.mxu0 0.0
        %707 = vmatmul.mubr.f32.gmra.mrb[0].mxu0 %v598
        %v708 = vpop.f32.mrb[0].mxu0
        %v709 = vadd.f32 %v611, %v708
        %v710 = vpop.f32.mrb[0].mxu0
        %711 = vmatprep.mubr.f32.mxu0 0.0
        %712 = vmatmul.mubr.f32.gmra.mrb[0].mxu0 %v599
        %v713 = vpop.f32.mrb[0].mxu0
        %v714 = vadd.f32 %v611, %v713
        %v715 = vpop.f32.mrb[0].mxu0
        %716 = vmatprep.mubr.f32.mxu0 0.0
        %717 = vmatmul.mubr.f32.gmra.mrb[0].mxu0 %v600
        %v718 = vpop.f32.mrb[0].mxu0
        %v719 = vadd.f32 %v611, %v718
        %v720 = vpop.f32.mrb[0].mxu0
        %721 = vmatprep.mubr.f32.mxu0 0.0
        %722 = vmatmul.mubr.f32.gmra.mrb[0].mxu0 %v601
        %v723 = vpop.f32.mrb[0].mxu0
        %v724 = vadd.f32 %v611, %v723
        %v725 = vpop.f32.mrb[0].mxu0
        %726 = vmatprep.mubr.f32.mxu0 0.0
        %727 = vmatmul.mubr.f32.gmra.mrb[0].mxu0 %v602
        %v728 = vpop.f32.mrb[0].mxu0
        %v729 = vadd.f32 %v611, %v728
        %v730 = vpop.f32.mrb[0].mxu0
        %731 = vmatprep.mubr.f32.mxu0 0.0
        %732 = vmatmul.mubr.f32.gmra.mrb[0].mxu0 %v603
        %v733 = vpop.f32.mrb[0].mxu0
        %v734 = vadd.f32 %v611, %v733
        %v735 = vpop.f32.mrb[0].mxu0
        %736 = vmatprep.mubr.f32.mxu0 0.0
        %737 = vmatmul.mubr.f32.gmra.mrb[0].mxu0 %v604
        %v738 = vpop.f32.mrb[0].mxu0
        %v739 = vadd.f32 %v611, %v738
        %v740 = vpop.f32.mrb[0].mxu0
        %741 = vmatprep.mubr.f32.mxu0 0.0
        %742 = vmatmul.mubr.f32.gmra.mrb[0].mxu0 %v605
        %v743 = vpop.f32.mrb[0].mxu0
        %v744 = vadd.f32 %v611, %v743
        %v745 = vpop.f32.mrb[0].mxu0
        %746 = vmatprep.mubr.f32.mxu0 0.0
        %747 = vmatmul.mubr.f32.gmra.mrb[0].mxu0 %v606
        %v748 = vpop.f32.mrb[0].mxu0
        %v749 = vadd.f32 %v611, %v748
        %v750 = vpop.f32.mrb[0].mxu0
        %751 = vmatprep.mubr.f32.mxu0 0.0
        %752 = vmatmul.mubr.f32.gmra.mrb[0].mxu0 %v607
        %v753 = vpop.f32.mrb[0].mxu0
        %v754 = vadd.f32 %v611, %v753
        %v755 = vpop.f32.mrb[0].mxu0
        %756 = vdwg.mxu0
        %v757 = vmul.f32 %v679, %v679
        %v758 = vmul.f32 %v684, %v684
        %v759 = vmul.f32 %v689, %v689
        %v760 = vmul.f32 %v694, %v694
        %v761 = vmul.f32 %v699, %v699
        %v762 = vmul.f32 %v704, %v704
        %v763 = vmul.f32 %v709, %v709
        %v764 = vmul.f32 %v714, %v714
        %v765 = vmul.f32 %v719, %v719
        %v766 = vmul.f32 %v724, %v724
        %v767 = vmul.f32 %v729, %v729
        %v768 = vmul.f32 %v734, %v734
        %v769 = vmul.f32 %v739, %v739
        %v770 = vmul.f32 %v744, %v744
        %v771 = vmul.f32 %v749, %v749
        %v772 = vmul.f32 %v754, %v754
        %773 = vmatprep.subr.mxu0 0.0
        %774 = vmatpush1.msra.mxu0 %v210
        %775 = vmatprep.subr.mxu0 0.0
        %776 = vmatpush1.msra.mxu0 %v211
        %777 = vmatprep.subr.mxu0 0.0
        %778 = vmatpush1.msra.mxu0 %v212
        %779 = vmatprep.subr.mxu0 0.0
        %780 = vmatpush1.msra.mxu0 %v213
        %781 = vmatprep.subr.mxu0 0.0
        %782 = vmatpush1.msra.mxu0 %v214
        %783 = vmatprep.subr.mxu0 0.0
        %784 = vmatpush1.msra.mxu0 %v215
        %785 = vmatprep.subr.mxu0 0.0
        %786 = vmatpush1.msra.mxu0 %v216
        %787 = vmatprep.subr.mxu0 0.0
        %788 = vmatpush1.msra.mxu0 %v217
        %789 = vmatprep.subr.mxu0 0.0
        %790 = vmatpush1.msra.mxu0 %v218
        %791 = vmatprep.subr.mxu0 0.0
        %792 = vmatpush1.msra.mxu0 %v219
        %793 = vmatprep.subr.mxu0 0.0
        %794 = vmatpush1.msra.mxu0 %v220
        %795 = vmatprep.subr.mxu0 0.0
        %796 = vmatpush1.msra.mxu0 %v221
        %797 = vmatprep.subr.mxu0 0.0
        %798 = vmatpush1.msra.mxu0 %v222
        %799 = vmatprep.subr.mxu0 0.0
        %800 = vmatpush1.msra.mxu0 %v223
        %801 = vmatprep.subr.mxu0 0.0
        %802 = vmatpush1.msra.mxu0 %v224
        %803 = vmatprep.subr.mxu0 0.0
        %804 = vmatpush1.msra.mxu0 %v225
        %805 = vmatprep.subr.mxu0 0.0
        %806 = vmatpush1.msra.mxu0 0.0
        %807 = vmatprep.subr.mxu0 0.0
        %808 = vmatpush1.msra.mxu0 0.0
        %809 = vmatprep.subr.mxu0 0.0
        %810 = vmatpush1.msra.mxu0 0.0
        %811 = vmatprep.subr.mxu0 0.0
        %812 = vmatpush1.msra.mxu0 0.0
        %813 = vmatprep.subr.mxu0 0.0
        %814 = vmatpush1.msra.mxu0 0.0
        %815 = vmatprep.subr.mxu0 0.0
        %816 = vmatpush1.msra.mxu0 0.0
        %817 = vmatprep.subr.mxu0 0.0
        %818 = vmatpush1.msra.mxu0 0.0
        %819 = vmatprep.subr.mxu0 0.0
        %820 = vmatpush1.msra.mxu0 0.0
        %821 = vmatprep.subr.mxu0 0.0
        %822 = vmatpush1.msra.mxu0 0.0
        %823 = vmatprep.subr.mxu0 0.0
        %824 = vmatpush1.msra.mxu0 0.0
        %825 = vmatprep.subr.mxu0 0.0
        %826 = vmatpush1.msra.mxu0 0.0
        %827 = vmatprep.subr.mxu0 0.0
        %828 = vmatpush1.msra.mxu0 0.0
        %829 = vmatprep.subr.mxu0 0.0
        %830 = vmatpush1.msra.mxu0 0.0
        %831 = vmatprep.subr.mxu0 0.0
        %832 = vmatpush1.msra.mxu0 0.0
        %833 = vmatprep.subr.mxu0 0.0
        %834 = vmatpush1.msra.mxu0 0.0
        %835 = vmatprep.subr.mxu0 0.0
        %836 = vmatpush1.msra.mxu0 0.0
        %837 = vmatprep.mubr.f32.mxu0 0.0
        %838 = vmatmul.mubr.f32.gmra.mrb[0].mxu0 %v757
        %v839 = vpop.f32.mrb[0].mxu0
        %v840 = vadd.f32 0.0, %v839
        %v841 = vpop.f32.mrb[0].mxu0
        %842 = vmatprep.mubr.f32.mxu0 0.0
        %843 = vmatmul.mubr.f32.gmra.mrb[0].mxu0 %v758
        %v844 = vpop.f32.mrb[0].mxu0
        %v845 = vadd.f32 0.0, %v844
        %v846 = vpop.f32.mrb[0].mxu0
        %847 = vmatprep.mubr.f32.mxu0 0.0
        %848 = vmatmul.mubr.f32.gmra.mrb[0].mxu0 %v759
        %v849 = vpop.f32.mrb[0].mxu0
        %v850 = vadd.f32 0.0, %v849
        %v851 = vpop.f32.mrb[0].mxu0
        %852 = vmatprep.mubr.f32.mxu0 0.0
        %853 = vmatmul.mubr.f32.gmra.mrb[0].mxu0 %v760
        %v854 = vpop.f32.mrb[0].mxu0
        %v855 = vadd.f32 0.0, %v854
        %v856 = vpop.f32.mrb[0].mxu0
        %857 = vmatprep.mubr.f32.mxu0 0.0
        %858 = vmatmul.mubr.f32.gmra.mrb[0].mxu0 %v761
        %v859 = vpop.f32.mrb[0].mxu0
        %v860 = vadd.f32 0.0, %v859
        %v861 = vpop.f32.mrb[0].mxu0
        %862 = vmatprep.mubr.f32.mxu0 0.0
        %863 = vmatmul.mubr.f32.gmra.mrb[0].mxu0 %v762
        %v864 = vpop.f32.mrb[0].mxu0
        %v865 = vadd.f32 0.0, %v864
        %v866 = vpop.f32.mrb[0].mxu0
        %867 = vmatprep.mubr.f32.mxu0 0.0
        %868 = vmatmul.mubr.f32.gmra.mrb[0].mxu0 %v763
        %v869 = vpop.f32.mrb[0].mxu0
        %v870 = vadd.f32 0.0, %v869
        %v871 = vpop.f32.mrb[0].mxu0
        %872 = vmatprep.mubr.f32.mxu0 0.0
        %873 = vmatmul.mubr.f32.gmra.mrb[0].mxu0 %v764
        %v874 = vpop.f32.mrb[0].mxu0
        %v875 = vadd.f32 0.0, %v874
        %v876 = vpop.f32.mrb[0].mxu0
        %877 = vmatprep.mubr.f32.mxu0 0.0
        %878 = vmatmul.mubr.f32.gmra.mrb[0].mxu0 %v765
        %v879 = vpop.f32.mrb[0].mxu0
        %v880 = vadd.f32 0.0, %v879
        %v881 = vpop.f32.mrb[0].mxu0
        %882 = vmatprep.mubr.f32.mxu0 0.0
        %883 = vmatmul.mubr.f32.gmra.mrb[0].mxu0 %v766
        %v884 = vpop.f32.mrb[0].mxu0
        %v885 = vadd.f32 0.0, %v884
        %v886 = vpop.f32.mrb[0].mxu0
        %887 = vmatprep.mubr.f32.mxu0 0.0
        %888 = vmatmul.mubr.f32.gmra.mrb[0].mxu0 %v767
        %v889 = vpop.f32.mrb[0].mxu0
        %v890 = vadd.f32 0.0, %v889
        %v891 = vpop.f32.mrb[0].mxu0
        %892 = vmatprep.mubr.f32.mxu0 0.0
        %893 = vmatmul.mubr.f32.gmra.mrb[0].mxu0 %v768
        %v894 = vpop.f32.mrb[0].mxu0
        %v895 = vadd.f32 0.0, %v894
        %v896 = vpop.f32.mrb[0].mxu0
        %897 = vmatprep.mubr.f32.mxu0 0.0
        %898 = vmatmul.mubr.f32.gmra.mrb[0].mxu0 %v769
        %v899 = vpop.f32.mrb[0].mxu0
        %v900 = vadd.f32 0.0, %v899
        %v901 = vpop.f32.mrb[0].mxu0
        %902 = vmatprep.mubr.f32.mxu0 0.0
        %903 = vmatmul.mubr.f32.gmra.mrb[0].mxu0 %v770
        %v904 = vpop.f32.mrb[0].mxu0
        %v905 = vadd.f32 0.0, %v904
        %v906 = vpop.f32.mrb[0].mxu0
        %907 = vmatprep.mubr.f32.mxu0 0.0
        %908 = vmatmul.mubr.f32.gmra.mrb[0].mxu0 %v771
        %v909 = vpop.f32.mrb[0].mxu0
        %v910 = vadd.f32 0.0, %v909
        %v911 = vpop.f32.mrb[0].mxu0
        %912 = vmatprep.mubr.f32.mxu0 0.0
        %913 = vmatmul.mubr.f32.gmra.mrb[0].mxu0 %v772
        %v914 = vpop.f32.mrb[0].mxu0
        %v915 = vadd.f32 0.0, %v914
        %v916 = vpop.f32.mrb[0].mxu0
        %917 = vdwg.mxu0
        %918 = vmatprep.subr.mxu0 0.0
        %919 = vmatpush1.msra.mxu0 %v194
        %920 = vmatprep.subr.mxu0 0.0
        %921 = vmatpush1.msra.mxu0 %v195
        %922 = vmatprep.subr.mxu0 0.0
        %923 = vmatpush1.msra.mxu0 %v196
        %924 = vmatprep.subr.mxu0 0.0
        %925 = vmatpush1.msra.mxu0 %v197
        %926 = vmatprep.subr.mxu0 0.0
        %927 = vmatpush1.msra.mxu0 %v198
        %928 = vmatprep.subr.mxu0 0.0
        %929 = vmatpush1.msra.mxu0 %v199
        %930 = vmatprep.subr.mxu0 0.0
        %931 = vmatpush1.msra.mxu0 %v200
        %932 = vmatprep.subr.mxu0 0.0
        %933 = vmatpush1.msra.mxu0 %v201
        %934 = vmatprep.subr.mxu0 0.0
        %935 = vmatpush1.msra.mxu0 %v202
        %936 = vmatprep.subr.mxu0 0.0
        %937 = vmatpush1.msra.mxu0 %v203
        %938 = vmatprep.subr.mxu0 0.0
        %939 = vmatpush1.msra.mxu0 %v204
        %940 = vmatprep.subr.mxu0 0.0
        %941 = vmatpush1.msra.mxu0 %v205
        %942 = vmatprep.subr.mxu0 0.0
        %943 = vmatpush1.msra.mxu0 %v206
        %944 = vmatprep.subr.mxu0 0.0
        %945 = vmatpush1.msra.mxu0 %v207
        %946 = vmatprep.subr.mxu0 0.0
        %947 = vmatpush1.msra.mxu0 %v208
        %948 = vmatprep.subr.mxu0 0.0
        %949 = vmatpush1.msra.mxu0 %v209
        %950 = vmatprep.subr.mxu0 0.0
        %951 = vmatpush1.msra.mxu0 0.0
        %952 = vmatprep.subr.mxu0 0.0
        %953 = vmatpush1.msra.mxu0 0.0
        %954 = vmatprep.subr.mxu0 0.0
        %955 = vmatpush1.msra.mxu0 0.0
        %956 = vmatprep.subr.mxu0 0.0
        %957 = vmatpush1.msra.mxu0 0.0
        %958 = vmatprep.subr.mxu0 0.0
        %959 = vmatpush1.msra.mxu0 0.0
        %960 = vmatprep.subr.mxu0 0.0
        %961 = vmatpush1.msra.mxu0 0.0
        %962 = vmatprep.subr.mxu0 0.0
        %963 = vmatpush1.msra.mxu0 0.0
        %964 = vmatprep.subr.mxu0 0.0
        %965 = vmatpush1.msra.mxu0 0.0
        %966 = vmatprep.subr.mxu0 0.0
        %967 = vmatpush1.msra.mxu0 0.0
        %968 = vmatprep.subr.mxu0 0.0
        %969 = vmatpush1.msra.mxu0 0.0
        %970 = vmatprep.subr.mxu0 0.0
        %971 = vmatpush1.msra.mxu0 0.0
        %972 = vmatprep.subr.mxu0 0.0
        %973 = vmatpush1.msra.mxu0 0.0
        %974 = vmatprep.subr.mxu0 0.0
        %975 = vmatpush1.msra.mxu0 0.0
        %976 = vmatprep.subr.mxu0 0.0
        %977 = vmatpush1.msra.mxu0 0.0
        %978 = vmatprep.subr.mxu0 0.0
        %979 = vmatpush1.msra.mxu0 0.0
        %980 = vmatprep.subr.mxu0 0.0
        %981 = vmatpush1.msra.mxu0 0.0
        %982 = vmatprep.mubr.f32.mxu0 0.0
        %983 = vmatmul.mubr.f32.gmra.mrb[0].mxu0 %v679
        %v984 = vpop.f32.mrb[0].mxu0
        %v985 = vadd.f32 %v840, %v984
        %v986 = vpop.f32.mrb[0].mxu0
        %987 = vmatprep.mubr.f32.mxu0 0.0
        %988 = vmatmul.mubr.f32.gmra.mrb[0].mxu0 %v684
        %v989 = vpop.f32.mrb[0].mxu0
        %v990 = vadd.f32 %v845, %v989
        %v991 = vpop.f32.mrb[0].mxu0
        %992 = vmatprep.mubr.f32.mxu0 0.0
        %993 = vmatmul.mubr.f32.gmra.mrb[0].mxu0 %v689
        %v994 = vpop.f32.mrb[0].mxu0
        %v995 = vadd.f32 %v850, %v994
        %v996 = vpop.f32.mrb[0].mxu0
        %997 = vmatprep.mubr.f32.mxu0 0.0
        %998 = vmatmul.mubr.f32.gmra.mrb[0].mxu0 %v694
        %v999 = vpop.f32.mrb[0].mxu0
        %v1000 = vadd.f32 %v855, %v999
        %v1001 = vpop.f32.mrb[0].mxu0
        %1002 = vmatprep.mubr.f32.mxu0 0.0
        %1003 = vmatmul.mubr.f32.gmra.mrb[0].mxu0 %v699
        %v1004 = vpop.f32.mrb[0].mxu0
        %v1005 = vadd.f32 %v860, %v1004
        %v1006 = vpop.f32.mrb[0].mxu0
        %1007 = vmatprep.mubr.f32.mxu0 0.0
        %1008 = vmatmul.mubr.f32.gmra.mrb[0].mxu0 %v704
        %v1009 = vpop.f32.mrb[0].mxu0
        %v1010 = vadd.f32 %v865, %v1009
        %v1011 = vpop.f32.mrb[0].mxu0
        %1012 = vmatprep.mubr.f32.mxu0 0.0
        %1013 = vmatmul.mubr.f32.gmra.mrb[0].mxu0 %v709
        %v1014 = vpop.f32.mrb[0].mxu0
        %v1015 = vadd.f32 %v870, %v1014
        %v1016 = vpop.f32.mrb[0].mxu0
        %1017 = vmatprep.mubr.f32.mxu0 0.0
        %1018 = vmatmul.mubr.f32.gmra.mrb[0].mxu0 %v714
        %v1019 = vpop.f32.mrb[0].mxu0
        %v1020 = vadd.f32 %v875, %v1019
        %v1021 = vpop.f32.mrb[0].mxu0
        %1022 = vmatprep.mubr.f32.mxu0 0.0
        %1023 = vmatmul.mubr.f32.gmra.mrb[0].mxu0 %v719
        %v1024 = vpop.f32.mrb[0].mxu0
        %v1025 = vadd.f32 %v880, %v1024
        %v1026 = vpop.f32.mrb[0].mxu0
        %1027 = vmatprep.mubr.f32.mxu0 0.0
        %1028 = vmatmul.mubr.f32.gmra.mrb[0].mxu0 %v724
        %v1029 = vpop.f32.mrb[0].mxu0
        %v1030 = vadd.f32 %v885, %v1029
        %v1031 = vpop.f32.mrb[0].mxu0
        %1032 = vmatprep.mubr.f32.mxu0 0.0
        %1033 = vmatmul.mubr.f32.gmra.mrb[0].mxu0 %v729
        %v1034 = vpop.f32.mrb[0].mxu0
        %v1035 = vadd.f32 %v890, %v1034
        %v1036 = vpop.f32.mrb[0].mxu0
        %1037 = vmatprep.mubr.f32.mxu0 0.0
        %1038 = vmatmul.mubr.f32.gmra.mrb[0].mxu0 %v734
        %v1039 = vpop.f32.mrb[0].mxu0
        %v1040 = vadd.f32 %v895, %v1039
        %v1041 = vpop.f32.mrb[0].mxu0
        %1042 = vmatprep.mubr.f32.mxu0 0.0
        %1043 = vmatmul.mubr.f32.gmra.mrb[0].mxu0 %v739
        %v1044 = vpop.f32.mrb[0].mxu0
        %v1045 = vadd.f32 %v900, %v1044
        %v1046 = vpop.f32.mrb[0].mxu0
        %1047 = vmatprep.mubr.f32.mxu0 0.0
        %1048 = vmatmul.mubr.f32.gmra.mrb[0].mxu0 %v744
        %v1049 = vpop.f32.mrb[0].mxu0
        %v1050 = vadd.f32 %v905, %v1049
        %v1051 = vpop.f32.mrb[0].mxu0
        %1052 = vmatprep.mubr.f32.mxu0 0.0
        %1053 = vmatmul.mubr.f32.gmra.mrb[0].mxu0 %v749
        %v1054 = vpop.f32.mrb[0].mxu0
        %v1055 = vadd.f32 %v910, %v1054
        %v1056 = vpop.f32.mrb[0].mxu0
        %1057 = vmatprep.mubr.f32.mxu0 0.0
        %1058 = vmatmul.mubr.f32.gmra.mrb[0].mxu0 %v754
        %v1059 = vpop.f32.mrb[0].mxu0
        %v1060 = vadd.f32 %v915, %v1059
        %v1061 = vpop.f32.mrb[0].mxu0
        %1062 = vdwg.mxu0
        %1063 = vst [vmem:[%s137] sm:$0xff] %v985
        %1064 = vst [vmem:[%s137 + $0x8] sm:$0xff] %v990
        %1065 = vst [vmem:[%s137 + $0x10] sm:$0xff] %v995
        %1066 = vst [vmem:[%s137 + $0x18] sm:$0xff] %v1000
        %1067 = vst [vmem:[%s137 + $0x20] sm:$0xff] %v1005
        %1068 = vst [vmem:[%s137 + $0x28] sm:$0xff] %v1010
        %1069 = vst [vmem:[%s137 + $0x30] sm:$0xff] %v1015
        %1070 = vst [vmem:[%s137 + $0x38] sm:$0xff] %v1020
        %1071 = vst [vmem:[%s137 + $0x40] sm:$0xff] %v1025
        %1072 = vst [vmem:[%s137 + $0x48] sm:$0xff] %v1030
        %1073 = vst [vmem:[%s137 + $0x50] sm:$0xff] %v1035
        %1074 = vst [vmem:[%s137 + $0x58] sm:$0xff] %v1040
        %1075 = vst [vmem:[%s137 + $0x60] sm:$0xff] %v1045
        %1076 = vst [vmem:[%s137 + $0x68] sm:$0xff] %v1050
        %1077 = vst [vmem:[%s137 + $0x70] sm:$0xff] %v1055
        %1078 = vst [vmem:[%s137 + $0x78] sm:$0xff] %v1060
        %s1079 = sand.u32 %s71, 1
        %s1080 = scalar_lea.sflag [#allocation3], %s1079
        %s1081 = sand.u32 %s71, 1
        %s1082 = smul.addr %s1081, 128
        %s1083 = scalar_lea.vmem [#allocation2], %s1082
        // Predicated region
        $region29: #{tpu_custom_call.1} parent=27 // pred_check
          %p1084 = pneg %p81
        $region30: #{tpu_custom_call.1} parent=27 // pred_check_branch
          %1086 = sbr.rel (%p1084) target = $region32
        $region31: #{tpu_custom_call.1} parent=27 // pred_region
          %s1087 = smul.u32 16, %s16
          %s1089 = ssub.s32 2048, 2048
          %1090 = vsyncadd %s1080, %s1089
          %s1091 = smul.addr %s1087, 128
          %s1092 = scalar_lea.hbm %s2, %s1091
          %s1093 = sshll.u32 %s1083, 4
          %s1094 = int_to_ptr.vmem [resolvable:$true] %s1093
          %1099 = dma.vmem_to_hbm [thread:$0]  %s1094, 2048, %s1092, %s1080, 128, 128, 8
        $region32: #{tpu_custom_call.1} parent=27 // pred_fallthru
          _
      $region28: #{tpu_custom_call.1} parent=5 // pred_fallthru
        _
      %p1100 = scmp.le.s32.totalorder 2, %s11
      // Predicated region
      $region33: #{tpu_custom_call.1} parent=5 // pred_check
        %p1101 = pneg %p1100
      $region34: #{tpu_custom_call.1} parent=5 // pred_check_branch
        %1103 = sbr.rel (%p1101) target = $region36
      $region35: #{tpu_custom_call.1} parent=5 // pred_region
        %s1104 = ssub.s32 %s11, 2
        // Predicated region
        $region37: #{tpu_custom_call.1} parent=35 // pred_check
          %p1105 = pneg %p87
        $region38: #{tpu_custom_call.1} parent=35 // pred_check_branch
          %1107 = sbr.rel (%p1105) target = $region40
        $region39: #{tpu_custom_call.1} parent=35 // pred_region
          %s1108 = sand.u32 %s72, 1
          %s1109 = scalar_lea.sflag [#allocation3], %s1108
          %s1110 = sand.u32 %s72, 1
          %s1111 = smul.addr %s1110, 128
          %s1112 = scalar_lea.vmem [#allocation2], %s1111
          %1113 = dma.done %s1109, 2048
        $region40: #{tpu_custom_call.1} parent=35 // pred_fallthru
          _
      $region36: #{tpu_custom_call.1} parent=5 // pred_fallthru
        _
    $region6: #{tpu_custom_call.1} parent=1 // loop_footer
      %s15 = sadd.s32 1, %s11
    $region7: #{tpu_custom_call.1} parent=1 // loop_footer_branch
      %10 = sbr.rel target = $region3
    $region8: #{tpu_custom_call.1} parent=1 // loop_exit
      _
    %1114 = vsyncpa [#allocation3], 1
    %s1115 = scalar_lea.sflag [#allocation3], 1
    %1116 = vsyncpa %s1115, 1

</llo_original>
